<compile_context>
chip_gen: v7x
topology: tpu7x:2x2x1
jax: 0.10.0
libtpu: 0.0.40
codegen_flags: <defaults>
</compile_context>

<pallas_src>
import jax
import jax.numpy as jnp
from jax.experimental import pallas as pl
from jax.experimental.pallas import tpu as pltpu

INPUT_DIM = 126
D_MODEL = 64
DROPOUT = 0.3  # identity at inference

_DEFAULT_TILE_M = 1024      # rows per grid step; ~0.5 MiB x-tile at K=128/f32
_MIN_PALLAS_ROWS = 128      # below this, plain XLA dot wins


def _round_up(x, m):
    return -(-x // m) * m


def _frame_embedding_kernel(x_ref, w_ref, b_ref, o_ref):
    # x_ref: [TM, Fp]  w_ref: [Fp, D]  b_ref: [1, D]  o_ref: [TM, D]
    acc = jnp.dot(x_ref[...], w_ref[...], preferred_element_type=jnp.float32)
    acc = acc + b_ref[...]                       # broadcast bias over rows
    o_ref[...] = acc.astype(o_ref.dtype)


def frame_embedding(x, w, b, *, tile_m=None, compute_dtype=None, use_pallas=None):
    """x: [T, B, F]; w: [F, D] (pre-transposed nn.Linear weight); b: [D].

    Returns [T, B, D] in x.dtype.  compute_dtype=jnp.bfloat16 casts x and w for
    the MXU feed (f32 accumulation is kept); use_pallas=True/False overrides the
    size-based dispatch.
    """
    T, B, F = x.shape
    Fw, D = w.shape
    assert Fw == F, (Fw, F)
    M = T * B
    out_dtype = x.dtype

    if use_pallas is None:
        use_pallas = M >= _MIN_PALLAS_ROWS
    if not use_pallas:
        # Tiny problem: fused XLA dot beats a standalone pallas_call.
        y = jnp.dot(x.reshape(M, F), w, preferred_element_type=jnp.float32) + b
        return y.astype(out_dtype).reshape(T, B, D)

    # ---- wrapper-side layout prep -------------------------------------------
    F_pad = _round_up(F, 128)                    # 126 -> 128: dense lane loads

    if tile_m is None:
        tile_m = min(_round_up(M, 8), _DEFAULT_TILE_M)
    tile_m = max(8, _round_up(tile_m, 8))        # f32 sublane multiple
    grid_m = pl.cdiv(M, tile_m)
    M_pad = grid_m * tile_m

    x2 = x.reshape(M, F)
    wk = w
    if compute_dtype is not None:
        x2 = x2.astype(compute_dtype)
        wk = wk.astype(compute_dtype)
    # Zero-pad rows (tail tile) and the contraction dim (exact result preserved).
    x2 = jnp.pad(x2, ((0, M_pad - M), (0, F_pad - F)))
    wk = jnp.pad(wk, ((0, F_pad - F), (0, 0)))
    b2 = b.reshape(1, D).astype(jnp.float32)

    out = pl.pallas_call(
        _frame_embedding_kernel,
        out_shape=jax.ShapeDtypeStruct((M_pad, D), out_dtype),
        grid_spec=pltpu.PrefetchScalarGridSpec(
            num_scalar_prefetch=0,
            grid=(grid_m,),
            in_specs=[
                pl.BlockSpec((tile_m, F_pad), lambda i: (i, 0)),  # x row tile
                pl.BlockSpec((F_pad, D), lambda i: (0, 0)),       # weight, resident
                pl.BlockSpec((1, D), lambda i: (0, 0)),           # bias, resident
            ],
            out_specs=pl.BlockSpec((tile_m, D), lambda i: (i, 0)),
        ),
        compiler_params=pltpu.CompilerParams(
            dimension_semantics=("parallel",),
        ),
    )(x2, wk, b2)

    return out[:M].reshape(T, B, D)


def init_params(key, feature_dim=INPUT_DIM, d_model=D_MODEL):
    # Deterministic init mimicking nn.Linear: U(-1/sqrt(F), 1/sqrt(F)).
    kw, kb = jax.random.split(key)
    bound = 1.0 / jnp.sqrt(jnp.float32(feature_dim))
    # PyTorch stores weight as [D, F]; we keep the transposed [F, D] layout.
    w = jax.random.uniform(kw, (feature_dim, d_model), jnp.float32, -bound, bound)
    b = jax.random.uniform(kb, (d_model,), jnp.float32, -bound, bound)
    return w, b


def _ref(x, w, b):
    T, B, F = x.shape
    y = x.reshape(T * B, F) @ w + b
    return y.reshape(T, B, w.shape[1])


if __name__ == "__main__":
    key = jax.random.PRNGKey(0)
    k_x1, k_x2, k_p = jax.random.split(key, 3)
    w, b = init_params(k_p)

    # Case 1: multi-tile grid (M = 256 rows, tile_m = 128 -> 2 grid steps).
    T1, B1 = 32, 8
    x1 = jax.random.normal(k_x1, (T1, B1, INPUT_DIM), dtype=jnp.float32)
    y1 = jax.block_until_ready(frame_embedding(x1, w, b, tile_m=128))
    assert y1.shape == (T1, B1, D_MODEL)
    assert jnp.allclose(y1, _ref(x1, w, b), atol=1e-5, rtol=1e-5)

    # Case 2: ragged M (T*B = 21, not a multiple of 8) forced through the
    # Pallas path to exercise the row-padding / tail handling.
    T2, B2 = 7, 3
    x2 = jax.random.normal(k_x2, (T2, B2, INPUT_DIM), dtype=jnp.float32)
    y2 = jax.block_until_ready(frame_embedding(x2, w, b, use_pallas=True))
    assert y2.shape == (T2, B2, D_MODEL)
    assert jnp.allclose(y2, _ref(x2, w, b), atol=1e-5, rtol=1e-5)

    print("KERNEL_OK")
</pallas_src>

<mosaic_0001>
module attributes {stable_mosaic.version = 11 : i64} {
  func.func @_frame_embedding_kernel(%arg0: i32, %arg1: memref<128x128xf32, #tpu.memory_space<vmem>>, %arg2: memref<128x64xf32, #tpu.memory_space<vmem>>, %arg3: memref<1x64xf32, #tpu.memory_space<vmem>>, %arg4: memref<128x64xf32, #tpu.memory_space<vmem>>) attributes {dimension_semantics = [#tpu.dimension_semantics<parallel>], iteration_bounds = array<i64: 2>, scalar_prefetch = 0 : i64, scratch_operands = 0 : i64, tpu.core_type = #tpu.core_type<tc>, window_params = [{transform_indices = @transform_0, window_bounds = array<i64: 128, 128>}, {pipeline_mode = #tpu.pipeline_mode<synchronous>, transform_indices = @transform_1, window_bounds = array<i64: 128, 64>}, {pipeline_mode = #tpu.pipeline_mode<synchronous>, transform_indices = @transform_2, window_bounds = array<i64: 1, 64>}, {transform_indices = @transform_3, window_bounds = array<i64: 128, 64>}]} {
    %c0 = arith.constant 0 : index
    %c0_0 = arith.constant 0 : index
    %0 = vector.load %arg1[%c0, %c0_0] : memref<128x128xf32, #tpu.memory_space<vmem>>, vector<128x128xf32>
    %c0_1 = arith.constant 0 : index
    %c0_2 = arith.constant 0 : index
    %1 = vector.load %arg2[%c0_1, %c0_2] : memref<128x64xf32, #tpu.memory_space<vmem>>, vector<128x64xf32>
    %cst = arith.constant dense<0.000000e+00> : vector<128x64xf32>
    %2 = tpu.matmul %0, %1, %cst {dimension_numbers = #tpu.dot_dimension_numbers<[1], [0], [0], [1], [0, 0, 1, 1], [], []>} : vector<128x128xf32>, vector<128x64xf32>, vector<128x64xf32> -> vector<128x64xf32>
    %c0_3 = arith.constant 0 : index
    %c0_4 = arith.constant 0 : index
    %3 = vector.load %arg3[%c0_3, %c0_4] : memref<1x64xf32, #tpu.memory_space<vmem>>, vector<1x64xf32>
    %4 = vector.broadcast %3 : vector<1x64xf32> to vector<128x64xf32>
    %5 = arith.addf %2, %4 : vector<128x64xf32>
    %c0_5 = arith.constant 0 : index
    %c0_6 = arith.constant 0 : index
    %6 = vector.load %arg4[%c0_5, %c0_6] : memref<128x64xf32, #tpu.memory_space<vmem>>, vector<128x64xf32>
    tpu.vector_store %arg4[%c0_5, %c0_6], %5 {strides = array<i32>} : memref<128x64xf32, #tpu.memory_space<vmem>>, vector<128x64xf32>,
    return
  }
  func.func @transform_0(%arg0: i32) -> (i32, i32) {
    %c0_i32 = arith.constant 0 : i32
    %c0_i32_0 = arith.constant 0 : i32
    return %arg0, %c0_i32 : i32, i32
  }
  func.func @transform_1(%arg0: i32) -> (i32, i32) {
    %c0_i32 = arith.constant 0 : i32
    %c0_i32_0 = arith.constant 0 : i32
    %c0_i32_1 = arith.constant 0 : i32
    return %c0_i32, %c0_i32_0 : i32, i32
  }
  func.func @transform_2(%arg0: i32) -> (i32, i32) {
    %c0_i32 = arith.constant 0 : i32
    %c0_i32_0 = arith.constant 0 : i32
    %c0_i32_1 = arith.constant 0 : i32
    return %c0_i32, %c0_i32_0 : i32, i32
  }
  func.func @transform_3(%arg0: i32) -> (i32, i32) {
    %c0_i32 = arith.constant 0 : i32
    %c0_i32_0 = arith.constant 0 : i32
    return %arg0, %c0_i32 : i32, i32
  }
}

</mosaic_0001>

<llo_original>
// kernel: tpu_custom_call.1
$region0: #{tpu_custom_call.1}
  #allocation0 [shape = 'u32[]', space=smem, size = 0x4, offset = 0x4, fixed_abs, tag = 'smem constant byte address 0x4 - core index']
  #allocation1 [shape = 'u32[144,128]{1,0:T(1,128)}', space=vmem, size = 0x12000, scoped, tag = 'internal scratch']
  %s0 = inlined_call_operand.hbm [shape: f32[256,128], index: 0, kind: input, shape index: {}]
  %s1 = inlined_call_operand.vmem [shape: f32[128,64], index: 1, kind: input, shape index: {}]
  %s2 = inlined_call_operand.vmem [shape: f32[1,64], index: 2, kind: input, shape index: {}]
  %s3 = inlined_call_operand.vmem [shape: f32[256,64], index: 3, kind: output, shape index: {}]
  %s4 = sld [smem:[#allocation0]]
  $region49: #{tpu_custom_call.1} parent=0
    _
  %s6 = ssub.s32 1, %s4
  %s7 = scalar_select 0, %s6, %s4
  $region1: #{tpu_custom_call.1} parent=0
    #allocation2 [shape = 'u8[131072]{0}', space=vmem, size = 0x20000, scoped, tag = 'input window, operand 0']
    #allocation3 [shape = 's32[2]{0}', space=sflag, size = 0x8, scoped, tag = 'scoped memory for tpu_custom_call.1']
    %8 = vsyncpa [#allocation3], 0
    %s9 = scalar_lea.sflag [#allocation3], 1
    %10 = vsyncpa %s9, 0
    loop: start=0, step=1, limit=4
    $region2: #{tpu_custom_call.1} parent=1 // loop_pre_header
      _
    $region3: #{tpu_custom_call.1} parent=1 // loop_header
      %s12 = sphi 0, %s16
      %p13 = scmp.ge.s32.totalorder %s12, 4
      %s22 = sphi 0, %s24
      %s25 = sphi 0, %s22
      %s26 = sphi 0, %s25
      %s42 = sphi 0, %s26
      %s46 = sphi 0, %s46
      %s48 = sphi 0, %s46
      %s49 = sphi 0, %s48
      %s63 = sphi 0, %s49
      %s67 = sphi 0, %s67
      %s69 = sphi 0, %s67
      %s70 = sphi 0, %s69
      %s84 = sphi 0, %s70
      %s90 = sphi 0, %s92
      %s93 = sphi 0, %s90
      %s94 = sphi 0, %s93
      %s110 = sphi 0, %s94
    $region4: #{tpu_custom_call.1} parent=1 // loop_header_branch
      %15 = sbr.rel (%p13) target = $region8
    $region5: #{tpu_custom_call.1} parent=1 // loop_body
      %s17 = ssub.s32 %s12, 1
      %s18 = ssub.s32 %s12, 2
      %s19 = sadd.s32 %s12, 1
      %s20 = ssub.s32 %s12, %s19
      %p21 = scmp.eq.s32.totalorder %s20, 0
      %s23 = sadd.s32 %s22, 1
      %s24 = scalar_select %p21, %s22, %s23
      %p27 = pneg %p21
      %p28 = scmp.eq.s32.totalorder %s12, 1
      %p29 = por %p27, %p28
      %p30 = scmp.ne.s32.totalorder %s22, %s25
      %p31 = scmp.eq.s32.totalorder %s12, 0
      %p32 = por %p30, %p31
      %p33 = scmp.ne.s32.totalorder %s22, %s25
      %p34 = scmp.eq.s32.totalorder %s17, 1
      %p35 = por %p33, %p34
      %p36 = scmp.ne.s32.totalorder %s25, %s26
      %p37 = scmp.eq.s32.totalorder %s17, 0
      %p38 = por %p36, %p37
      %p39 = scmp.ne.s32.totalorder %s25, %s26
      %p40 = scmp.eq.s32.totalorder %s18, 1
      %p41 = por %p39, %p40
      %p43 = scmp.ne.s32.totalorder %s26, %s42
      %p44 = scmp.eq.s32.totalorder %s18, 0
      %p45 = por %p43, %p44
      %s47 = sadd.s32 %s46, 1
      %p50 = scmp.eq.s32.totalorder %s12, 1
      %p51 = scmp.ne.s32.totalorder %s46, %s48
      %p52 = scmp.eq.s32.totalorder %s12, 0
      %p53 = por %p51, %p52
      %p54 = scmp.ne.s32.totalorder %s46, %s48
      %p55 = scmp.eq.s32.totalorder %s17, 1
      %p56 = por %p54, %p55
      %p57 = scmp.ne.s32.totalorder %s48, %s49
      %p58 = scmp.eq.s32.totalorder %s17, 0
      %p59 = por %p57, %p58
      %p60 = scmp.ne.s32.totalorder %s48, %s49
      %p61 = scmp.eq.s32.totalorder %s18, 1
      %p62 = por %p60, %p61
      %p64 = scmp.ne.s32.totalorder %s49, %s63
      %p65 = scmp.eq.s32.totalorder %s18, 0
      %p66 = por %p64, %p65
      %s68 = sadd.s32 %s67, 1
      %p71 = scmp.eq.s32.totalorder %s12, 1
      %p72 = scmp.ne.s32.totalorder %s67, %s69
      %p73 = scmp.eq.s32.totalorder %s12, 0
      %p74 = por %p72, %p73
      %p75 = scmp.ne.s32.totalorder %s67, %s69
      %p76 = scmp.eq.s32.totalorder %s17, 1
      %p77 = por %p75, %p76
      %p78 = scmp.ne.s32.totalorder %s69, %s70
      %p79 = scmp.eq.s32.totalorder %s17, 0
      %p80 = por %p78, %p79
      %p81 = scmp.ne.s32.totalorder %s69, %s70
      %p82 = scmp.eq.s32.totalorder %s18, 1
      %p83 = por %p81, %p82
      %p85 = scmp.ne.s32.totalorder %s70, %s84
      %p86 = scmp.eq.s32.totalorder %s18, 0
      %p87 = por %p85, %p86
      %s88 = ssub.s32 %s12, %s19
      %p89 = scmp.eq.s32.totalorder %s88, 0
      %s91 = sadd.s32 %s90, 1
      %s92 = scalar_select %p89, %s90, %s91
      %p95 = pneg %p89
      %p96 = scmp.eq.s32.totalorder %s12, 1
      %p97 = por %p95, %p96
      %p98 = scmp.ne.s32.totalorder %s90, %s93
      %p99 = scmp.eq.s32.totalorder %s12, 0
      %p100 = por %p98, %p99
      %p101 = scmp.ne.s32.totalorder %s90, %s93
      %p102 = scmp.eq.s32.totalorder %s17, 1
      %p103 = por %p101, %p102
      %p104 = scmp.ne.s32.totalorder %s93, %s94
      %p105 = scmp.eq.s32.totalorder %s17, 0
      %p106 = por %p104, %p105
      %p107 = scmp.ne.s32.totalorder %s93, %s94
      %p108 = scmp.eq.s32.totalorder %s18, 1
      %p109 = por %p107, %p108
      %p111 = scmp.ne.s32.totalorder %s94, %s110
      %p112 = scmp.eq.s32.totalorder %s18, 0
      %p113 = por %p111, %p112
      %p114 = scmp.le.s32.totalorder 1, %s12
      %p115 = scmp.lt.s32.totalorder %s12, 3
      %p116 = pnand %p114, %p115
      %p117 = pneg %p116
      // Predicated region
      $region9: #{tpu_custom_call.1} parent=5 // pred_check
        _
      $region10: #{tpu_custom_call.1} parent=5 // pred_check_branch
        %119 = sbr.rel (%p116) target = $region12
      $region11: #{tpu_custom_call.1} parent=5 // pred_region
        %s120 = ssub.s32 %s12, 1
        // Predicated region
        $region13: #{tpu_custom_call.1} parent=11 // pred_check
          %p121 = pneg %p59
        $region14: #{tpu_custom_call.1} parent=11 // pred_check_branch
          %123 = sbr.rel (%p121) target = $region16
        $region15: #{tpu_custom_call.1} parent=11 // pred_region
          _
        $region16: #{tpu_custom_call.1} parent=11 // pred_fallthru
          _
        // Predicated region
        $region17: #{tpu_custom_call.1} parent=11 // pred_check
          %p124 = pneg %p80
        $region18: #{tpu_custom_call.1} parent=11 // pred_check_branch
          %126 = sbr.rel (%p124) target = $region20
        $region19: #{tpu_custom_call.1} parent=11 // pred_region
          _
        $region20: #{tpu_custom_call.1} parent=11 // pred_fallthru
          _
      $region12: #{tpu_custom_call.1} parent=5 // pred_fallthru
        _
      %p127 = scmp.lt.s32.totalorder %s12, 2
      // Predicated region
      $region21: #{tpu_custom_call.1} parent=5 // pred_check
        %p128 = pneg %p127
      $region22: #{tpu_custom_call.1} parent=5 // pred_check_branch
        %130 = sbr.rel (%p128) target = $region24
      $region23: #{tpu_custom_call.1} parent=5 // pred_region
        // Predicated region
        $region25: #{tpu_custom_call.1} parent=23 // pred_check
          %p131 = pneg %p32
        $region26: #{tpu_custom_call.1} parent=23 // pred_check_branch
          %133 = sbr.rel (%p131) target = $region28
        $region27: #{tpu_custom_call.1} parent=23 // pred_region
          %s134 = sand.u32 %s22, 1
          %s135 = scalar_lea.sflag [#allocation3], %s134
          %s136 = sand.u32 %s22, 1
          %s137 = smul.addr %s136, 128
          %s138 = scalar_lea.vmem [#allocation2], %s137
          %s139 = smul.u32 16, %s12
          %s141 = ssub.s32 2048, 2048
          %142 = vsyncadd %s135, %s141
          %s143 = smul.addr %s139, 128
          %s144 = scalar_lea.hbm %s0, %s143
          %s145 = sshll.u32 %s138, 4
          %s146 = int_to_ptr.vmem [resolvable:$true] %s145
          %151 = dma.hbm_to_vmem [thread:$0]  %s144, 2048, %s146, %s135, 128, 128, 8
        $region28: #{tpu_custom_call.1} parent=23 // pred_fallthru
          _
      $region24: #{tpu_custom_call.1} parent=5 // pred_fallthru
        _
      %p152 = scmp.le.s32.totalorder 1, %s12
      %p153 = scmp.lt.s32.totalorder %s12, 3
      %p154 = pnand %p152, %p153
      %p155 = pneg %p154
      // Predicated region
      $region29: #{tpu_custom_call.1} parent=5 // pred_check
        _
      $region30: #{tpu_custom_call.1} parent=5 // pred_check_branch
        %157 = sbr.rel (%p154) target = $region32
      $region31: #{tpu_custom_call.1} parent=5 // pred_region
        %s158 = ssub.s32 %s12, 1
        %s159 = sand.u32 %s25, 1
        %s160 = scalar_lea.sflag [#allocation3], %s159
        %s161 = sand.u32 %s25, 1
        %s162 = smul.addr %s161, 128
        %s163 = scalar_lea.vmem [#allocation2], %s162
        // Predicated region
        $region33: #{tpu_custom_call.1} parent=31 // pred_check
          %p164 = pneg %p38
        $region34: #{tpu_custom_call.1} parent=31 // pred_check_branch
          %166 = sbr.rel (%p164) target = $region36
        $region35: #{tpu_custom_call.1} parent=31 // pred_region
          %167 = dma.done %s160, 2048
        $region36: #{tpu_custom_call.1} parent=31 // pred_fallthru
          _
        %s168 = sand.u32 %s25, 1
        %s169 = scalar_lea.sflag [#allocation3], %s168
        %s170 = sand.u32 %s25, 1
        %s171 = smul.addr %s170, 128
        %s172 = scalar_lea.vmem [#allocation2], %s171
        %p173 = pneg %p38
        %p174 = pneg %p35
        %p175 = pneg %p59
        %p176 = pneg %p56
        %p177 = pneg %p80
        %p178 = pneg %p77
        %p179 = pneg %p106
        %p180 = pneg %p103
        %s181 = smul.u32 16, %s17
        %p182 = scmp.lt.s32.totalorder %s181, 31
        %s183 = scalar_select %p182, %s181, 31
        %s184 = smul.addr %s183, 8
        %s185 = scalar_lea.vmem %s3, %s184
        %s186 = smul.u32 16, %s17
        %s187 = smul.u32 16, %s17
        %p188 = scmp.lt.s32.totalorder %s187, 31
        %s189 = scalar_select %p188, %s187, 31
        %s190 = smul.addr %s189, 8
        %s191 = scalar_lea.vmem %s3, %s190
        %s192 = smul.u32 16, %s17
        %v193 = vld [vmem:[%s163] sm:$0xff]
        %v194 = vld [vmem:[%s163 + $0x8] sm:$0xff]
        %v195 = vld [vmem:[%s163 + $0x10] sm:$0xff]
        %v196 = vld [vmem:[%s163 + $0x18] sm:$0xff]
        %v197 = vld [vmem:[%s163 + $0x20] sm:$0xff]
        %v198 = vld [vmem:[%s163 + $0x28] sm:$0xff]
        %v199 = vld [vmem:[%s163 + $0x30] sm:$0xff]
        %v200 = vld [vmem:[%s163 + $0x38] sm:$0xff]
        %v201 = vld [vmem:[%s163 + $0x40] sm:$0xff]
        %v202 = vld [vmem:[%s163 + $0x48] sm:$0xff]
        %v203 = vld [vmem:[%s163 + $0x50] sm:$0xff]
        %v204 = vld [vmem:[%s163 + $0x58] sm:$0xff]
        %v205 = vld [vmem:[%s163 + $0x60] sm:$0xff]
        %v206 = vld [vmem:[%s163 + $0x68] sm:$0xff]
        %v207 = vld [vmem:[%s163 + $0x70] sm:$0xff]
        %v208 = vld [vmem:[%s163 + $0x78] sm:$0xff]
        %v209 = vld [vmem:[%s1] sm:$0xff]
        %v210 = vld [vmem:[%s1 + $0x8] sm:$0xff]
        %v211 = vld [vmem:[%s1 + $0x10] sm:$0xff]
        %v212 = vld [vmem:[%s1 + $0x18] sm:$0xff]
        %v213 = vld [vmem:[%s1 + $0x20] sm:$0xff]
        %v214 = vld [vmem:[%s1 + $0x28] sm:$0xff]
        %v215 = vld [vmem:[%s1 + $0x30] sm:$0xff]
        %v216 = vld [vmem:[%s1 + $0x38] sm:$0xff]
        %v217 = vld [vmem:[%s1 + $0x40] sm:$0xff]
        %v218 = vld [vmem:[%s1 + $0x48] sm:$0xff]
        %v219 = vld [vmem:[%s1 + $0x50] sm:$0xff]
        %v220 = vld [vmem:[%s1 + $0x58] sm:$0xff]
        %v221 = vld [vmem:[%s1 + $0x60] sm:$0xff]
        %v222 = vld [vmem:[%s1 + $0x68] sm:$0xff]
        %v223 = vld [vmem:[%s1 + $0x70] sm:$0xff]
        %v224 = vld [vmem:[%s1 + $0x78] sm:$0xff]
        %v225 = vld [vmem:[%s2] sm:$0x1]
        %v227 = vlaneseq
        %v228 = vshrl.u32 %v227, 7
        %v229 = vsub.s32 0, %v228
        %v230 = vrot.slane %v225, %v229
        %232 = vmatprep.subr.mxu0 0.0
        %233 = vmatpush1.msra.mxu0 %v209
        %234 = vmatprep.subr.mxu0 0.0
        %235 = vmatpush1.msra.mxu0 %v210
        %236 = vmatprep.subr.mxu0 0.0
        %237 = vmatpush1.msra.mxu0 %v211
        %238 = vmatprep.subr.mxu0 0.0
        %239 = vmatpush1.msra.mxu0 %v212
        %240 = vmatprep.subr.mxu0 0.0
        %241 = vmatpush1.msra.mxu0 %v213
        %242 = vmatprep.subr.mxu0 0.0
        %243 = vmatpush1.msra.mxu0 %v214
        %244 = vmatprep.subr.mxu0 0.0
        %245 = vmatpush1.msra.mxu0 %v215
        %246 = vmatprep.subr.mxu0 0.0
        %247 = vmatpush1.msra.mxu0 %v216
        %248 = vmatprep.subr.mxu0 0.0
        %249 = vmatpush1.msra.mxu0 %v217
        %250 = vmatprep.subr.mxu0 0.0
        %251 = vmatpush1.msra.mxu0 %v218
        %252 = vmatprep.subr.mxu0 0.0
        %253 = vmatpush1.msra.mxu0 %v219
        %254 = vmatprep.subr.mxu0 0.0
        %255 = vmatpush1.msra.mxu0 %v220
        %256 = vmatprep.subr.mxu0 0.0
        %257 = vmatpush1.msra.mxu0 %v221
        %258 = vmatprep.subr.mxu0 0.0
        %259 = vmatpush1.msra.mxu0 %v222
        %260 = vmatprep.subr.mxu0 0.0
        %261 = vmatpush1.msra.mxu0 %v223
        %262 = vmatprep.subr.mxu0 0.0
        %263 = vmatpush1.msra.mxu0 %v224
        %264 = vmatprep.subr.mxu0 0.0
        %265 = vmatpush1.msra.mxu0 0.0
        %266 = vmatprep.subr.mxu0 0.0
        %267 = vmatpush1.msra.mxu0 0.0
        %268 = vmatprep.subr.mxu0 0.0
        %269 = vmatpush1.msra.mxu0 0.0
        %270 = vmatprep.subr.mxu0 0.0
        %271 = vmatpush1.msra.mxu0 0.0
        %272 = vmatprep.subr.mxu0 0.0
        %273 = vmatpush1.msra.mxu0 0.0
        %274 = vmatprep.subr.mxu0 0.0
        %275 = vmatpush1.msra.mxu0 0.0
        %276 = vmatprep.subr.mxu0 0.0
        %277 = vmatpush1.msra.mxu0 0.0
        %278 = vmatprep.subr.mxu0 0.0
        %279 = vmatpush1.msra.mxu0 0.0
        %280 = vmatprep.subr.mxu0 0.0
        %281 = vmatpush1.msra.mxu0 0.0
        %282 = vmatprep.subr.mxu0 0.0
        %283 = vmatpush1.msra.mxu0 0.0
        %284 = vmatprep.subr.mxu0 0.0
        %285 = vmatpush1.msra.mxu0 0.0
        %286 = vmatprep.subr.mxu0 0.0
        %287 = vmatpush1.msra.mxu0 0.0
        %288 = vmatprep.subr.mxu0 0.0
        %289 = vmatpush1.msra.mxu0 0.0
        %290 = vmatprep.subr.mxu0 0.0
        %291 = vmatpush1.msra.mxu0 0.0
        %292 = vmatprep.subr.mxu0 0.0
        %293 = vmatpush1.msra.mxu0 0.0
        %294 = vmatprep.subr.mxu0 0.0
        %295 = vmatpush1.msra.mxu0 0.0
        %296 = vmatprep.mubr.f32.mxu0 0.0
        %297 = vmatmul.mubr.f32.gmra.mrb[0].mxu0 %v193
        %v298 = vpop.f32.mrb[0].mxu0
        %v299 = vadd.f32 %v230, %v298
        %v300 = vpop.f32.mrb[0].mxu0
        %301 = vmatprep.mubr.f32.mxu0 0.0
        %302 = vmatmul.mubr.f32.gmra.mrb[0].mxu0 %v194
        %v303 = vpop.f32.mrb[0].mxu0
        %v304 = vadd.f32 %v230, %v303
        %v305 = vpop.f32.mrb[0].mxu0
        %306 = vmatprep.mubr.f32.mxu0 0.0
        %307 = vmatmul.mubr.f32.gmra.mrb[0].mxu0 %v195
        %v308 = vpop.f32.mrb[0].mxu0
        %v309 = vadd.f32 %v230, %v308
        %v310 = vpop.f32.mrb[0].mxu0
        %311 = vmatprep.mubr.f32.mxu0 0.0
        %312 = vmatmul.mubr.f32.gmra.mrb[0].mxu0 %v196
        %v313 = vpop.f32.mrb[0].mxu0
        %v314 = vadd.f32 %v230, %v313
        %v315 = vpop.f32.mrb[0].mxu0
        %316 = vmatprep.mubr.f32.mxu0 0.0
        %317 = vmatmul.mubr.f32.gmra.mrb[0].mxu0 %v197
        %v318 = vpop.f32.mrb[0].mxu0
        %v319 = vadd.f32 %v230, %v318
        %v320 = vpop.f32.mrb[0].mxu0
        %321 = vmatprep.mubr.f32.mxu0 0.0
        %322 = vmatmul.mubr.f32.gmra.mrb[0].mxu0 %v198
        %v323 = vpop.f32.mrb[0].mxu0
        %v324 = vadd.f32 %v230, %v323
        %v325 = vpop.f32.mrb[0].mxu0
        %326 = vmatprep.mubr.f32.mxu0 0.0
        %327 = vmatmul.mubr.f32.gmra.mrb[0].mxu0 %v199
        %v328 = vpop.f32.mrb[0].mxu0
        %v329 = vadd.f32 %v230, %v328
        %v330 = vpop.f32.mrb[0].mxu0
        %331 = vmatprep.mubr.f32.mxu0 0.0
        %332 = vmatmul.mubr.f32.gmra.mrb[0].mxu0 %v200
        %v333 = vpop.f32.mrb[0].mxu0
        %v334 = vadd.f32 %v230, %v333
        %v335 = vpop.f32.mrb[0].mxu0
        %336 = vmatprep.mubr.f32.mxu0 0.0
        %337 = vmatmul.mubr.f32.gmra.mrb[0].mxu0 %v201
        %v338 = vpop.f32.mrb[0].mxu0
        %v339 = vadd.f32 %v230, %v338
        %v340 = vpop.f32.mrb[0].mxu0
        %341 = vmatprep.mubr.f32.mxu0 0.0
        %342 = vmatmul.mubr.f32.gmra.mrb[0].mxu0 %v202
        %v343 = vpop.f32.mrb[0].mxu0
        %v344 = vadd.f32 %v230, %v343
        %v345 = vpop.f32.mrb[0].mxu0
        %346 = vmatprep.mubr.f32.mxu0 0.0
        %347 = vmatmul.mubr.f32.gmra.mrb[0].mxu0 %v203
        %v348 = vpop.f32.mrb[0].mxu0
        %v349 = vadd.f32 %v230, %v348
        %v350 = vpop.f32.mrb[0].mxu0
        %351 = vmatprep.mubr.f32.mxu0 0.0
        %352 = vmatmul.mubr.f32.gmra.mrb[0].mxu0 %v204
        %v353 = vpop.f32.mrb[0].mxu0
        %v354 = vadd.f32 %v230, %v353
        %v355 = vpop.f32.mrb[0].mxu0
        %356 = vmatprep.mubr.f32.mxu0 0.0
        %357 = vmatmul.mubr.f32.gmra.mrb[0].mxu0 %v205
        %v358 = vpop.f32.mrb[0].mxu0
        %v359 = vadd.f32 %v230, %v358
        %v360 = vpop.f32.mrb[0].mxu0
        %361 = vmatprep.mubr.f32.mxu0 0.0
        %362 = vmatmul.mubr.f32.gmra.mrb[0].mxu0 %v206
        %v363 = vpop.f32.mrb[0].mxu0
        %v364 = vadd.f32 %v230, %v363
        %v365 = vpop.f32.mrb[0].mxu0
        %366 = vmatprep.mubr.f32.mxu0 0.0
        %367 = vmatmul.mubr.f32.gmra.mrb[0].mxu0 %v207
        %v368 = vpop.f32.mrb[0].mxu0
        %v369 = vadd.f32 %v230, %v368
        %v370 = vpop.f32.mrb[0].mxu0
        %371 = vmatprep.mubr.f32.mxu0 0.0
        %372 = vmatmul.mubr.f32.gmra.mrb[0].mxu0 %v208
        %v373 = vpop.f32.mrb[0].mxu0
        %v374 = vadd.f32 %v230, %v373
        %v375 = vpop.f32.mrb[0].mxu0
        %376 = vdwg.mxu0
        %vm377 = vcmask 523264
        %378 = vst.msk [vmem:[%s191] sm:$0xff] %vm377, %v299
        %379 = vst.msk [vmem:[%s191 + $0x8] sm:$0xff] %vm377, %v304
        %380 = vst.msk [vmem:[%s191 + $0x10] sm:$0xff] %vm377, %v309
        %381 = vst.msk [vmem:[%s191 + $0x18] sm:$0xff] %vm377, %v314
        %382 = vst.msk [vmem:[%s191 + $0x20] sm:$0xff] %vm377, %v319
        %383 = vst.msk [vmem:[%s191 + $0x28] sm:$0xff] %vm377, %v324
        %384 = vst.msk [vmem:[%s191 + $0x30] sm:$0xff] %vm377, %v329
        %385 = vst.msk [vmem:[%s191 + $0x38] sm:$0xff] %vm377, %v334
        %386 = vst.msk [vmem:[%s191 + $0x40] sm:$0xff] %vm377, %v339
        %387 = vst.msk [vmem:[%s191 + $0x48] sm:$0xff] %vm377, %v344
        %388 = vst.msk [vmem:[%s191 + $0x50] sm:$0xff] %vm377, %v349
        %389 = vst.msk [vmem:[%s191 + $0x58] sm:$0xff] %vm377, %v354
        %390 = vst.msk [vmem:[%s191 + $0x60] sm:$0xff] %vm377, %v359
        %391 = vst.msk [vmem:[%s191 + $0x68] sm:$0xff] %vm377, %v364
        %392 = vst.msk [vmem:[%s191 + $0x70] sm:$0xff] %vm377, %v369
        %393 = vst.msk [vmem:[%s191 + $0x78] sm:$0xff] %vm377, %v374
        %s394 = smul.u32 16, %s17
        %p395 = scmp.lt.s32.totalorder %s394, 31
        %s396 = scalar_select %p395, %s394, 31
        %s397 = smul.addr %s396, 8
        %s398 = scalar_lea.vmem %s3, %s397
        // Predicated region
        $region37: #{tpu_custom_call.1} parent=31 // pred_check
          %p399 = pneg %p103
        $region38: #{tpu_custom_call.1} parent=31 // pred_check_branch
          %401 = sbr.rel (%p399) target = $region40
        $region39: #{tpu_custom_call.1} parent=31 // pred_region
          %s402 = smul.u32 16, %s17
        $region40: #{tpu_custom_call.1} parent=31 // pred_fallthru
          _
      $region32: #{tpu_custom_call.1} parent=5 // pred_fallthru
        _
      %p403 = scmp.le.s32.totalorder 2, %s12
      // Predicated region
      $region41: #{tpu_custom_call.1} parent=5 // pred_check
        %p404 = pneg %p403
      $region42: #{tpu_custom_call.1} parent=5 // pred_check_branch
        %406 = sbr.rel (%p404) target = $region44
      $region43: #{tpu_custom_call.1} parent=5 // pred_region
        %s407 = ssub.s32 %s12, 2
        // Predicated region
        $region45: #{tpu_custom_call.1} parent=43 // pred_check
          %p408 = pneg %p109
        $region46: #{tpu_custom_call.1} parent=43 // pred_check_branch
          %410 = sbr.rel (%p408) target = $region48
        $region47: #{tpu_custom_call.1} parent=43 // pred_region
          %s411 = smul.u32 16, %s18
          %p412 = scmp.lt.s32.totalorder %s411, 31
          %s413 = scalar_select %p412, %s411, 31
          %s414 = smul.addr %s413, 8
          %s415 = scalar_lea.vmem %s3, %s414
        $region48: #{tpu_custom_call.1} parent=43 // pred_fallthru
          _
      $region44: #{tpu_custom_call.1} parent=5 // pred_fallthru
        _
    $region6: #{tpu_custom_call.1} parent=1 // loop_footer
      %s16 = sadd.s32 1, %s12
    $region7: #{tpu_custom_call.1} parent=1 // loop_footer_branch
      %11 = sbr.rel target = $region3
    $region8: #{tpu_custom_call.1} parent=1 // loop_exit
      _
    %416 = vsyncpa [#allocation3], 1
    %s417 = scalar_lea.sflag [#allocation3], 1
    %418 = vsyncpa %s417, 1

</llo_original>
